<compile_context>
chip_gen: v7x
topology: tpu7x:2x2x1
jax: 0.10.0
libtpu: 0.0.40
codegen_flags: <defaults>
</compile_context>

<pallas_src>
import functools

import jax
import jax.numpy as jnp
from jax.experimental import pallas as pl
from jax.experimental.pallas import tpu as pltpu


def _hash_lowbias32(x):
    """Cheap 32-bit integer mixer (lowbias32); input/output uint32."""
    x = x ^ (x >> 16)
    x = x * jnp.uint32(0x7FEB352D)
    x = x ^ (x >> 15)
    x = x * jnp.uint32(0x846CA68B)
    x = x ^ (x >> 16)
    return x


def _lenet_classifier_kernel(seed_ref, x_ref, w_ref, b_ref, o_ref, *, train, p):
    """relu -> (optional dropout) -> linear on one (TB, H) batch tile."""
    x = jnp.maximum(x_ref[...].astype(jnp.float32), 0.0)          # ReLU (VPU)

    if train and p > 0.0:
        if p >= 1.0:
            x = jnp.zeros_like(x)
        else:
            tb, h = x.shape
            # Global element index -> per-element random bits (portable hash,
            # no TPU-only PRNG primitives). program_id offset makes the mask
            # unique per batch tile.
            row = jax.lax.broadcasted_iota(jnp.int32, (tb, h), 0)
            col = jax.lax.broadcasted_iota(jnp.int32, (tb, h), 1)
            g_row = row + pl.program_id(0) * tb
            flat = (g_row * h + col).astype(jnp.uint32)
            seed = seed_ref[0].astype(jnp.uint32)
            z = flat + (seed * jnp.uint32(0x9E3779B9)) + jnp.uint32(0x9E3779B9)
            z = _hash_lowbias32(z)
            # Top 23 bits -> uniform in [0, 1).
            u = (z >> 9).astype(jnp.int32).astype(jnp.float32) * (1.0 / float(1 << 23))
            keep = u < (1.0 - p)
            x = jnp.where(keep, x * (1.0 / (1.0 - p)), 0.0)       # inverted dropout

    # fc2: out = x @ W^T + b  (W pre-transposed & zero-padded -> (H, 128)).
    out = jnp.dot(x, w_ref[...], preferred_element_type=jnp.float32)   # MXU
    o_ref[...] = out + b_ref[...]                                       # bias broadcast


def lenet_classifier(feat, w, b, *, train=False, p=0.5, seed=0, tile_b=256):
    """Pallas wrapper.

    feat: (B, H) float; w: (O, H) PyTorch Linear layout; b: (O,).
    Returns (B, O) float32 logits.
    """
    B, H = feat.shape
    O, H2 = w.shape
    assert H == H2, "weight / feature hidden-dim mismatch"

    # Lane-dense output: pad classes up to a multiple of 128.
    O_pad = ((O + 127) // 128) * 128
    w_t = jnp.zeros((H, O_pad), jnp.float32).at[:, :O].set(w.T.astype(jnp.float32))
    b_pad = jnp.zeros((1, O_pad), jnp.float32).at[:, :O].set(
        b.reshape(1, O).astype(jnp.float32))

    # Batch tile: whole batch if small, else a sublane-aligned tile.
    TB = B if B <= tile_b else tile_b
    if TB != B and TB % 8 != 0:
        TB = max(8, (TB // 8) * 8)
    grid = (pl.cdiv(B, TB),)

    seed_arr = jnp.array([seed], dtype=jnp.int32)
    kernel = functools.partial(_lenet_classifier_kernel, train=train, p=p)

    grid_spec = pltpu.PrefetchScalarGridSpec(
        num_scalar_prefetch=1,                               # seed scalar -> SMEM
        grid=grid,
        in_specs=[
            pl.BlockSpec((TB, H), lambda i, seed: (i, 0)),     # feat tile (pipelined)
            pl.BlockSpec((H, O_pad), lambda i, seed: (0, 0)),  # W^T resident
            pl.BlockSpec((1, O_pad), lambda i, seed: (0, 0)),  # bias resident
        ],
        out_specs=pl.BlockSpec((TB, O_pad), lambda i, seed: (i, 0)),
    )

    out_pad = pl.pallas_call(
        kernel,
        out_shape=jax.ShapeDtypeStruct((B, O_pad), jnp.float32),
        grid_spec=grid_spec,
        compiler_params=pltpu.CompilerParams(
            dimension_semantics=("parallel",)),
        cost_estimate=pl.CostEstimate(
            flops=2 * B * H * O_pad,
            transcendentals=0,
            bytes_accessed=B * H * 4 + H * O_pad * 4 + B * O_pad * 4,
        ),
    )(seed_arr, feat, w_t, b_pad)

    return out_pad[:, :O]


if __name__ == "__main__":
    # Small shapes consistent with the module: batch=2, hidden=32, classes=10.
    B, HIDDEN, OUT = 2, 32, 10

    key = jax.random.PRNGKey(0)
    k_feat, k_w, k_b = jax.random.split(key, 3)

    feat = jax.random.normal(k_feat, (B, HIDDEN), dtype=jnp.float32)

    # PyTorch-style Linear init U(-1/sqrt(H), 1/sqrt(H)).
    bound = 1.0 / (HIDDEN ** 0.5)
    w = jax.random.uniform(k_w, (OUT, HIDDEN), jnp.float32, -bound, bound)  # (10, H)
    b = jax.random.uniform(k_b, (OUT,), jnp.float32, -bound, bound)         # (10,)

    # Eval-mode forward (dropout is identity), matching module after .eval().
    out = jax.block_until_ready(lenet_classifier(feat, w, b, train=False))
    ref = jnp.maximum(feat, 0.0) @ w.T + b
    assert out.shape == (B, OUT)
    assert jnp.allclose(out, ref, atol=1e-5, rtol=1e-5)

    # Training-mode forward (in-kernel hash-PRNG dropout, p=0.5).
    out_train = jax.block_until_ready(
        lenet_classifier(feat, w, b, train=True, p=0.5, seed=123))
    assert out_train.shape == (B, OUT)
    assert bool(jnp.all(jnp.isfinite(out_train)))

    print("KERNEL_OK")
</pallas_src>

<mosaic_0001>
module attributes {stable_mosaic.version = 11 : i64} {
  func.func @_lenet_classifier_kernel(%arg0: i32, %arg1: memref<1xi32, #tpu.memory_space<smem>>, %arg2: memref<2x32xf32, #tpu.memory_space<vmem>>, %arg3: memref<32x128xf32, #tpu.memory_space<vmem>>, %arg4: memref<1x128xf32, #tpu.memory_space<vmem>>, %arg5: memref<2x128xf32, #tpu.memory_space<vmem>>) attributes {dimension_semantics = [#tpu.dimension_semantics<parallel>], iteration_bounds = array<i64: 1>, scalar_prefetch = 1 : i64, scratch_operands = 0 : i64, tpu.core_type = #tpu.core_type<tc>, window_params = [{transform_indices = @transform_0, window_bounds = array<i64: 2, 32>}, {pipeline_mode = #tpu.pipeline_mode<synchronous>, transform_indices = @transform_1, window_bounds = array<i64: 32, 128>}, {pipeline_mode = #tpu.pipeline_mode<synchronous>, transform_indices = @transform_2, window_bounds = array<i64: 1, 128>}, {transform_indices = @transform_3, window_bounds = array<i64: 2, 128>}]} {
    %c0 = arith.constant 0 : index
    %c0_0 = arith.constant 0 : index
    %0 = vector.load %arg2[%c0, %c0_0] : memref<2x32xf32, #tpu.memory_space<vmem>>, vector<2x32xf32>
    %cst = arith.constant 0.000000e+00 : f32
    %1 = vector.broadcast %cst : f32 to vector<2x32xf32>
    %2 = arith.maximumf %0, %1 : vector<2x32xf32>
    %c0_1 = arith.constant 0 : index
    %c0_2 = arith.constant 0 : index
    %3 = vector.load %arg3[%c0_1, %c0_2] : memref<32x128xf32, #tpu.memory_space<vmem>>, vector<32x128xf32>
    %cst_3 = arith.constant dense<0.000000e+00> : vector<2x128xf32>
    %4 = tpu.matmul %2, %3, %cst_3 {dimension_numbers = #tpu.dot_dimension_numbers<[1], [0], [0], [1], [0, 0, 1, 1], [], []>} : vector<2x32xf32>, vector<32x128xf32>, vector<2x128xf32> -> vector<2x128xf32>
    %c0_4 = arith.constant 0 : index
    %c0_5 = arith.constant 0 : index
    %5 = vector.load %arg4[%c0_4, %c0_5] : memref<1x128xf32, #tpu.memory_space<vmem>>, vector<1x128xf32>
    %6 = vector.broadcast %5 : vector<1x128xf32> to vector<2x128xf32>
    %7 = arith.addf %4, %6 : vector<2x128xf32>
    %c0_6 = arith.constant 0 : index
    %c0_7 = arith.constant 0 : index
    %8 = vector.load %arg5[%c0_6, %c0_7] : memref<2x128xf32, #tpu.memory_space<vmem>>, vector<2x128xf32>
    tpu.vector_store %arg5[%c0_6, %c0_7], %7 {strides = array<i32>} : memref<2x128xf32, #tpu.memory_space<vmem>>, vector<2x128xf32>,
    return
  }
  func.func @transform_0(%arg0: i32, %arg1: memref<1xi32, #tpu.memory_space<smem>>) -> (i32, i32) {
    %c0_i32 = arith.constant 0 : i32
    %c0_i32_0 = arith.constant 0 : i32
    return %arg0, %c0_i32 : i32, i32
  }
  func.func @transform_1(%arg0: i32, %arg1: memref<1xi32, #tpu.memory_space<smem>>) -> (i32, i32) {
    %c0_i32 = arith.constant 0 : i32
    %c0_i32_0 = arith.constant 0 : i32
    %c0_i32_1 = arith.constant 0 : i32
    return %c0_i32, %c0_i32_0 : i32, i32
  }
  func.func @transform_2(%arg0: i32, %arg1: memref<1xi32, #tpu.memory_space<smem>>) -> (i32, i32) {
    %c0_i32 = arith.constant 0 : i32
    %c0_i32_0 = arith.constant 0 : i32
    %c0_i32_1 = arith.constant 0 : i32
    return %c0_i32, %c0_i32_0 : i32, i32
  }
  func.func @transform_3(%arg0: i32, %arg1: memref<1xi32, #tpu.memory_space<smem>>) -> (i32, i32) {
    %c0_i32 = arith.constant 0 : i32
    %c0_i32_0 = arith.constant 0 : i32
    return %arg0, %c0_i32 : i32, i32
  }
}

</mosaic_0001>

<llo_original>
// kernel: tpu_custom_call.1
$region0: #{tpu_custom_call.1}
  #allocation0 [shape = 'u32[]', space=smem, size = 0x4, offset = 0x4, fixed_abs, tag = 'smem constant byte address 0x4 - core index']
  #allocation1 [shape = 'u32[144,128]{1,0:T(1,128)}', space=vmem, size = 0x12000, scoped, tag = 'internal scratch']
  #allocation2 [shape = 's32[1]{0}', space=sflag, size = 0x4, scoped, tag = 'scoped memory for tpu_custom_call.1']
  #allocation3 [shape = 's32[1]{0:T(128)S(6)}', space=smem, size = 0x200, scoped, tag = 'prefetched SMEM operand 0']
  %s0 = inlined_call_operand.<no memory space> [shape: s32[1], index: 0, kind: input, shape index: {}]
  %s1 = inlined_call_operand.vmem [shape: f32[2,32], index: 1, kind: input, shape index: {}]
  %s2 = inlined_call_operand.hbm [shape: f32[32,128], index: 2, kind: input, shape index: {}]
  %s3 = inlined_call_operand.vmem [shape: f32[1,128], index: 3, kind: input, shape index: {}]
  %s4 = inlined_call_operand.hbm [shape: f32[2,128], index: 4, kind: output, shape index: {}]
  %s5 = sld [smem:[#allocation0]]
  $region26: #{tpu_custom_call.1} parent=0
    _
  %s7 = ssub.s32 1, %s5
  %s8 = scalar_select 0, %s7, %s5
  %9 = sst [smem:[#allocation3]] %s0
  $region1: #{tpu_custom_call.1} parent=0
    #allocation4 [shape = 'u8[16384]{0}', space=vmem, size = 0x4000, scoped, tag = 'input window, operand 2, single buffered']
    #allocation5 [shape = 's32[1]{0}', space=sflag, size = 0x4, scoped, tag = 'scoped memory for tpu_custom_call.1']
    #allocation6 [shape = 's32[1]{0}', space=sflag, size = 0x4, scoped, tag = 'scoped memory for tpu_custom_call.1']
    #allocation7 [shape = 'u8[1024]{0}', space=vmem, size = 0x400, scoped, tag = 'output window, operand 0, single buffered']
    %10 = vsyncpa [#allocation5], 0
    %11 = vsyncpa [#allocation6], 0
    // Predicated region
    $region2: #{tpu_custom_call.1} parent=1 // pred_check
      _
    $region3: #{tpu_custom_call.1} parent=1 // pred_check_branch
      %13 = sbr.rel (0) target = $region5
    $region4: #{tpu_custom_call.1} parent=1 // pred_region
      _
    $region5: #{tpu_custom_call.1} parent=1 // pred_fallthru
      _
    // Predicated region
    $region6: #{tpu_custom_call.1} parent=1 // pred_check
      _
    $region7: #{tpu_custom_call.1} parent=1 // pred_check_branch
      %15 = sbr.rel (0) target = $region9
    $region8: #{tpu_custom_call.1} parent=1 // pred_region
      %s17 = ssub.s32 512, 512
      %18 = vsyncadd [#allocation5], %s17
      %s19 = sshll.u32 [#allocation4], 4
      %s20 = int_to_ptr.vmem [resolvable:$true] %s19
      %25 = dma.hbm_to_vmem [thread:$0]  %s2, 512, %s20, [#allocation5], 128, 128, 8
    $region9: #{tpu_custom_call.1} parent=1 // pred_fallthru
      _
    // Predicated region
    $region10: #{tpu_custom_call.1} parent=1 // pred_check
      _
    $region11: #{tpu_custom_call.1} parent=1 // pred_check_branch
      %27 = sbr.rel (0) target = $region13
    $region12: #{tpu_custom_call.1} parent=1 // pred_region
      _
    $region13: #{tpu_custom_call.1} parent=1 // pred_fallthru
      _
    // Predicated region
    $region14: #{tpu_custom_call.1} parent=1 // pred_check
      _
    $region15: #{tpu_custom_call.1} parent=1 // pred_check_branch
      %29 = sbr.rel (0) target = $region17
    $region16: #{tpu_custom_call.1} parent=1 // pred_region
      %30 = dma.done [#allocation5], 512
    $region17: #{tpu_custom_call.1} parent=1 // pred_fallthru
      _
    %v31 = vld [vmem:[%s1] sm:$0x3]
    %v32 = vmax.f32 %v31, 0.0
    %v33 = vld [vmem:[#allocation4] sm:$0xff]
    %v34 = vld [vmem:[#allocation4 + $0x8] sm:$0xff]
    %v35 = vld [vmem:[#allocation4 + $0x10] sm:$0xff]
    %v36 = vld [vmem:[#allocation4 + $0x18] sm:$0xff]
    %v37 = vld [vmem:[%s3] sm:$0x1]
    %v39 = vlaneseq
    %v40 = vshrl.u32 %v39, 7
    %v41 = vsub.s32 0, %v40
    %v42 = vrot.slane %v37, %v41
    %vm44 = vcmask 261120
    %v46 = vsel %vm44, %v32, 0
    %48 = vmatprep.subr.mxu0 0.0
    %49 = vmatpush1.msra.mxu0 %v33
    %50 = vmatprep.subr.mxu0 0.0
    %51 = vmatpush1.msra.mxu0 %v34
    %52 = vmatprep.subr.mxu0 0.0
    %53 = vmatpush1.msra.mxu0 %v35
    %54 = vmatprep.subr.mxu0 0.0
    %55 = vmatpush1.msra.mxu0 %v36
    %56 = vmatprep.subr.mxu0 0.0
    %57 = vmatpush1.msra.mxu0 0.0
    %58 = vmatprep.subr.mxu0 0.0
    %59 = vmatpush1.msra.mxu0 0.0
    %60 = vmatprep.subr.mxu0 0.0
    %61 = vmatpush1.msra.mxu0 0.0
    %62 = vmatprep.subr.mxu0 0.0
    %63 = vmatpush1.msra.mxu0 0.0
    %64 = vmatprep.subr.mxu0 0.0
    %65 = vmatpush1.msra.mxu0 0.0
    %66 = vmatprep.subr.mxu0 0.0
    %67 = vmatpush1.msra.mxu0 0.0
    %68 = vmatprep.subr.mxu0 0.0
    %69 = vmatpush1.msra.mxu0 0.0
    %70 = vmatprep.subr.mxu0 0.0
    %71 = vmatpush1.msra.mxu0 0.0
    %72 = vmatprep.subr.mxu0 0.0
    %73 = vmatpush1.msra.mxu0 0.0
    %74 = vmatprep.subr.mxu0 0.0
    %75 = vmatpush1.msra.mxu0 0.0
    %76 = vmatprep.subr.mxu0 0.0
    %77 = vmatpush1.msra.mxu0 0.0
    %78 = vmatprep.subr.mxu0 0.0
    %79 = vmatpush1.msra.mxu0 0.0
    %80 = vmatprep.subr.mxu0 0.0
    %81 = vmatpush1.msra.mxu0 0.0
    %82 = vmatprep.subr.mxu0 0.0
    %83 = vmatpush1.msra.mxu0 0.0
    %84 = vmatprep.subr.mxu0 0.0
    %85 = vmatpush1.msra.mxu0 0.0
    %86 = vmatprep.subr.mxu0 0.0
    %87 = vmatpush1.msra.mxu0 0.0
    %88 = vmatprep.subr.mxu0 0.0
    %89 = vmatpush1.msra.mxu0 0.0
    %90 = vmatprep.subr.mxu0 0.0
    %91 = vmatpush1.msra.mxu0 0.0
    %92 = vmatprep.subr.mxu0 0.0
    %93 = vmatpush1.msra.mxu0 0.0
    %94 = vmatprep.subr.mxu0 0.0
    %95 = vmatpush1.msra.mxu0 0.0
    %96 = vmatprep.subr.mxu0 0.0
    %97 = vmatpush1.msra.mxu0 0.0
    %98 = vmatprep.subr.mxu0 0.0
    %99 = vmatpush1.msra.mxu0 0.0
    %100 = vmatprep.subr.mxu0 0.0
    %101 = vmatpush1.msra.mxu0 0.0
    %102 = vmatprep.subr.mxu0 0.0
    %103 = vmatpush1.msra.mxu0 0.0
    %104 = vmatprep.subr.mxu0 0.0
    %105 = vmatpush1.msra.mxu0 0.0
    %106 = vmatprep.subr.mxu0 0.0
    %107 = vmatpush1.msra.mxu0 0.0
    %108 = vmatprep.subr.mxu0 0.0
    %109 = vmatpush1.msra.mxu0 0.0
    %110 = vmatprep.subr.mxu0 0.0
    %111 = vmatpush1.msra.mxu0 0.0
    %112 = vmatprep.mubr.f32.mxu0 0.0
    %113 = vmatmul.mubr.f32.gmra.mrb[0].mxu0 %v46
    %v114 = vpop.f32.mrb[0].mxu0
    %v115 = vadd.f32 %v42, %v114
    %v116 = vpop.f32.mrb[0].mxu0
    %117 = vdwg.mxu0
    %118 = vst [vmem:[#allocation7] sm:$0x3] %v115
    // Predicated region
    $region18: #{tpu_custom_call.1} parent=1 // pred_check
      _
    $region19: #{tpu_custom_call.1} parent=1 // pred_check_branch
      %120 = sbr.rel (0) target = $region21
    $region20: #{tpu_custom_call.1} parent=1 // pred_region
      %s122 = ssub.s32 32, 32
      %123 = vsyncadd [#allocation6], %s122
      %s125 = sshll.u32 [#allocation7], 4
      %s126 = int_to_ptr.vmem [resolvable:$true] %s125
      %128 = dma.vmem_to_hbm [thread:$0]  %s126, 32, %s4, [#allocation6]
    $region21: #{tpu_custom_call.1} parent=1 // pred_fallthru
      _
    // Predicated region
    $region22: #{tpu_custom_call.1} parent=1 // pred_check
      _
    $region23: #{tpu_custom_call.1} parent=1 // pred_check_branch
      %130 = sbr.rel (0) target = $region25
    $region24: #{tpu_custom_call.1} parent=1 // pred_region
      %131 = dma.done [#allocation6], 32
    $region25: #{tpu_custom_call.1} parent=1 // pred_fallthru
      _
    %132 = vsyncpa [#allocation5], 1
    %133 = vsyncpa [#allocation6], 1

</llo_original>
